<compile_context>
chip_gen: v7x
topology: tpu7x:2x2x1
jax: 0.10.0
libtpu: 0.0.40
codegen_flags: <defaults>
</compile_context>

<pallas_src>
import jax
import jax.numpy as jnp
from jax import lax
from jax.experimental import pallas as pl
from jax.experimental.pallas import tpu as pltpu


# ----------------------------------------------------------------------------
# Helpers
# ----------------------------------------------------------------------------
def _vmem_limit_bytes(nbytes):
    """Explicit scoped-VMEM budget: actual footprint x2 (double buffers) + headroom."""
    return int(min(48 << 20, max(16 << 20, 2 * nbytes + (2 << 20))))


def _choose_row_tile(m, cap=512):
    """Row tile for stage 1: <= cap, divides m, sublane-aligned (mult of 8)."""
    if m <= cap:
        return m
    t = cap
    while t >= 8:
        if m % t == 0:
            return t
        t -= 8
    return m  # fall back to whole-array block (correctness over perf)


def _choose_time_chunk(s, b, h, budget_bytes=8 << 20):
    """Time chunk for stage 2: divides S, chunk gx+out (double-buffered) fits budget."""
    per_t = (3 * h + h) * b * 4 * 2  # f32 gx + out, x2 for double buffering
    max_t = max(1, budget_bytes // per_t)
    for t in range(min(s, max_t), 0, -1):
        if s % t == 0:
            return t
    return 1


# ----------------------------------------------------------------------------
# Stage 1: hoisted input projection, tiled over rows, parallel grid.
# ----------------------------------------------------------------------------
def _input_proj_kernel(x_ref, w_ref, b_ref, o_ref):
    """gx = x @ W + b for one (TM, E) row tile."""
    o_ref[...] = (
        jnp.dot(x_ref[...], w_ref[...], preferred_element_type=jnp.float32)
        + b_ref[...]
    ).astype(o_ref.dtype)


def _pallas_input_proj(x2d, w, b):
    M, E = x2d.shape
    G = w.shape[1]
    tm = _choose_row_tile(M)
    footprint = (tm * E + E * G + G + tm * G) * 4
    return pl.pallas_call(
        _input_proj_kernel,
        grid=(M // tm,),
        in_specs=[
            pl.BlockSpec((tm, E), lambda i: (i, 0)),
            pl.BlockSpec((E, G), lambda i: (0, 0)),
            pl.BlockSpec((1, G), lambda i: (0, 0)),
        ],
        out_specs=pl.BlockSpec((tm, G), lambda i: (i, 0)),
        out_shape=jax.ShapeDtypeStruct((M, G), jnp.float32),
        compiler_params=pltpu.CompilerParams(
            dimension_semantics=("parallel",),
            vmem_limit_bytes=_vmem_limit_bytes(footprint)),
    )(x2d, w, b)


# ----------------------------------------------------------------------------
# Stage 2: serial recurrence, time-chunked grid, h carried in VMEM scratch.
# ----------------------------------------------------------------------------
def _gru_recurrence_kernel(gx_ref, whh_ref, bhn_ref, out_ref, h_scratch):
    T, B, _ = gx_ref.shape
    H = out_ref.shape[2]

    # Zero initial hidden state on the first time chunk only.
    @pl.when(pl.program_id(0) == 0)
    def _():
        h_scratch[...] = jnp.zeros_like(h_scratch)

    # Recurrent weights / bias loaded once per chunk; live in vregs/VMEM values.
    whh = whh_ref[...]          # (H, 3H) fused [Whr^T | Whz^T | Whn^T]
    bhn = bhn_ref[...]          # (1, H)

    def step(i, h):
        gx = gx_ref[i]                                       # (B, 3H), h-independent
        # Single fused recurrent matmul per step (one MXU issue, one W_hh push).
        gh = jnp.dot(h, whh, preferred_element_type=jnp.float32)   # (B, 3H)
        # One sigmoid over the contiguous r|z lanes (2 EUP pushes/step total).
        rz = jax.nn.sigmoid(gx[:, :2 * H] + gh[:, :2 * H])   # gx carries b_ih + b_hh(r,z)
        r = rz[:, :H]
        z = rz[:, H:]
        n = jnp.tanh(gx[:, 2 * H:] + r * (gh[:, 2 * H:] + bhn))    # b_hn inside r*(...)
        h_new = (1.0 - z) * n + z * h
        out_ref[i] = h_new.astype(out_ref.dtype)
        return h_new

    h0 = h_scratch[...]
    # Moderate unroll: lets the scheduler hoist h-independent loads/stores
    # across the serial h dependency without blowing vreg pressure.
    h_final = lax.fori_loop(0, T, step, h0, unroll=min(8, T))
    h_scratch[...] = h_final


def gru_layer(x, wih_t, whh_t, b_fold, bhn):
    """Run one GRU layer over the full sequence.

    x:      (S, B, E) float32
    wih_t:  (E, 3H)   pre-transposed input weights
    whh_t:  (H, 3H)   pre-transposed fused recurrent weights
    b_fold: (1, 3H)   b_ih with b_hh[r,z] folded in
    bhn:    (1, H)    recurrent bias of the n gate
    returns (output (S, B, H), h_last (B, H))
    """
    S, B, E = x.shape
    H = whh_t.shape[0]

    # Stage 1: one tiled matmul pass over all time steps.
    gx = _pallas_input_proj(x.reshape(S * B, E), wih_t, b_fold)   # (S*B, 3H)
    gx = gx.reshape(S, B, 3 * H)                                  # free reshape

    # Stage 2: serial recurrence over time chunks.
    T = _choose_time_chunk(S, B, H)
    footprint = (T * B * 3 * H + T * B * H + H * 3 * H + H) * 4
    out = pl.pallas_call(
        _gru_recurrence_kernel,
        grid=(S // T,),
        in_specs=[
            pl.BlockSpec((T, B, 3 * H), lambda c: (c, 0, 0)),   # gx time chunk
            pl.BlockSpec((H, 3 * H), lambda c: (0, 0)),         # fused W_hh^T
            pl.BlockSpec((1, H), lambda c: (0, 0)),             # b_hn
        ],
        out_specs=pl.BlockSpec((T, B, H), lambda c: (c, 0, 0)),
        out_shape=jax.ShapeDtypeStruct((S, B, H), jnp.float32),
        scratch_shapes=[pltpu.VMEM((B, H), jnp.float32)],        # carried hidden state
        compiler_params=pltpu.CompilerParams(
            dimension_semantics=("arbitrary",),                  # time is serial
            vmem_limit_bytes=_vmem_limit_bytes(footprint)),
    )(gx, whh_t, bhn)

    # Final hidden state of a single-direction GRU is simply output[-1].
    return out, out[-1]


class Encoder:
    """JAX/Pallas port of the PyTorch Encoder (multi-layer GRU, zero init state)."""

    def __init__(self, batch_size, seq_size, word_emb_size, hidden_size,
                 n_layers, dropout, key):
        self.batch_size = batch_size
        self.seq_size = seq_size
        self.word_emb_size = word_emb_size
        self.hidden_size = hidden_size
        self.n_layers = n_layers
        self.dropout = dropout

        H = hidden_size
        # Deterministic init matching nn.GRU: U(-1/sqrt(H), 1/sqrt(H)).
        k = 1.0 / jnp.sqrt(jnp.float32(H))
        self.params = []          # raw PyTorch-layout params (for reference check)
        self.kernel_params = []   # pre-transposed / bias-folded params (per forward)
        for layer in range(n_layers):
            in_size = word_emb_size if layer == 0 else H
            key, k1, k2, k3, k4 = jax.random.split(key, 5)
            w_ih = jax.random.uniform(k1, (3 * H, in_size), jnp.float32, -k, k)
            w_hh = jax.random.uniform(k2, (3 * H, H), jnp.float32, -k, k)
            b_ih = jax.random.uniform(k3, (3 * H,), jnp.float32, -k, k)
            b_hh = jax.random.uniform(k4, (3 * H,), jnp.float32, -k, k)
            self.params.append((w_ih, w_hh, b_ih, b_hh))

            # One-time weight prep (removes per-call transpose passes in HBM).
            wih_t = w_ih.T                                            # (E, 3H)
            whh_t = w_hh.T                                            # (H, 3H)
            b_fold = b_ih.at[:2 * H].add(b_hh[:2 * H]).reshape(1, 3 * H)
            bhn = b_hh[2 * H:].reshape(1, H)
            self.kernel_params.append((wih_t, whh_t, b_fold, bhn))

    def forward(self, input_seq):
        # input_seq: (seq, batch, emb); h0 is zeros (handled inside the kernel).
        x = input_seq
        h_lasts = []
        for (wih_t, whh_t, b_fold, bhn) in self.kernel_params:
            # TODO(synk): inter-layer dropout mask (training mode) not applied.
            x, h_last = gru_layer(x, wih_t, whh_t, b_fold, bhn)
            h_lasts.append(h_last)
        h = jnp.stack(h_lasts, axis=0)          # (n_layers, batch, hidden)
        return x, h                             # output: (seq, batch, hidden)


def _gru_layer_ref(x, w_ih, w_hh, b_ih, b_hh):
    """Pure-JAX reference for correctness checking."""
    S, B, _ = x.shape
    H = w_hh.shape[1]

    def step(h, xt):
        gx = xt @ w_ih.T + b_ih
        gh = h @ w_hh.T + b_hh
        r = jax.nn.sigmoid(gx[:, :H] + gh[:, :H])
        z = jax.nn.sigmoid(gx[:, H:2 * H] + gh[:, H:2 * H])
        n = jnp.tanh(gx[:, 2 * H:] + r * gh[:, 2 * H:])
        h_new = (1.0 - z) * n + z * h
        return h_new, h_new

    h0 = jnp.zeros((B, H), jnp.float32)
    h_last, out = lax.scan(step, h0, x)
    return out, h_last


if __name__ == "__main__":
    batch_size, seq_size, word_emb_size, hidden_size = 2, 8, 32, 32
    n_layers, dropout = 2, 0.0

    key = jax.random.PRNGKey(0)
    key, pkey, xkey = jax.random.split(key, 3)

    enc = Encoder(batch_size, seq_size, word_emb_size, hidden_size,
                  n_layers, dropout, pkey)

    # input_seq: (seq, batch, emb) -- seq-first, like the PyTorch GRU default.
    input_seq = jax.random.normal(xkey, (seq_size, batch_size, word_emb_size),
                                  jnp.float32)

    output, h = enc.forward(input_seq)
    jax.block_until_ready((output, h))

    assert output.shape == (seq_size, batch_size, hidden_size)
    assert h.shape == (n_layers, batch_size, hidden_size)

    # Reference check against pure-JAX scan implementation.
    x_ref = input_seq
    h_ref_list = []
    for (w_ih, w_hh, b_ih, b_hh) in enc.params:
        x_ref, h_last_ref = _gru_layer_ref(x_ref, w_ih, w_hh, b_ih, b_hh)
        h_ref_list.append(h_last_ref)
    h_ref = jnp.stack(h_ref_list, axis=0)

    assert jnp.allclose(output, x_ref, atol=1e-4, rtol=1e-4)
    assert jnp.allclose(h, h_ref, atol=1e-4, rtol=1e-4)

    print("KERNEL_OK")
</pallas_src>

<mosaic_0001>
module attributes {stable_mosaic.version = 11 : i64} {
  func.func @_input_proj_kernel(%arg0: i32, %arg1: memref<16x32xf32, #tpu.memory_space<vmem>>, %arg2: memref<32x96xf32, #tpu.memory_space<vmem>>, %arg3: memref<1x96xf32, #tpu.memory_space<vmem>>, %arg4: memref<16x96xf32, #tpu.memory_space<vmem>>) attributes {dimension_semantics = [#tpu.dimension_semantics<parallel>], iteration_bounds = array<i64: 1>, scalar_prefetch = 0 : i64, scratch_operands = 0 : i64, tpu.core_type = #tpu.core_type<tc>, window_params = [{transform_indices = @transform_0, window_bounds = array<i64: 16, 32>}, {pipeline_mode = #tpu.pipeline_mode<synchronous>, transform_indices = @transform_1, window_bounds = array<i64: 32, 96>}, {pipeline_mode = #tpu.pipeline_mode<synchronous>, transform_indices = @transform_2, window_bounds = array<i64: 1, 96>}, {transform_indices = @transform_3, window_bounds = array<i64: 16, 96>}]} {
    %c0 = arith.constant 0 : index
    %c0_0 = arith.constant 0 : index
    %0 = vector.load %arg1[%c0, %c0_0] : memref<16x32xf32, #tpu.memory_space<vmem>>, vector<16x32xf32>
    %c0_1 = arith.constant 0 : index
    %c0_2 = arith.constant 0 : index
    %1 = vector.load %arg2[%c0_1, %c0_2] : memref<32x96xf32, #tpu.memory_space<vmem>>, vector<32x96xf32>
    %cst = arith.constant dense<0.000000e+00> : vector<16x96xf32>
    %2 = tpu.matmul %0, %1, %cst {dimension_numbers = #tpu.dot_dimension_numbers<[1], [0], [0], [1], [0, 0, 1, 1], [], []>} : vector<16x32xf32>, vector<32x96xf32>, vector<16x96xf32> -> vector<16x96xf32>
    %c0_3 = arith.constant 0 : index
    %c0_4 = arith.constant 0 : index
    %3 = vector.load %arg3[%c0_3, %c0_4] : memref<1x96xf32, #tpu.memory_space<vmem>>, vector<1x96xf32>
    %4 = vector.broadcast %3 : vector<1x96xf32> to vector<16x96xf32>
    %5 = arith.addf %2, %4 : vector<16x96xf32>
    %c0_5 = arith.constant 0 : index
    %c0_6 = arith.constant 0 : index
    %6 = vector.load %arg4[%c0_5, %c0_6] : memref<16x96xf32, #tpu.memory_space<vmem>>, vector<16x96xf32>
    tpu.vector_store %arg4[%c0_5, %c0_6], %5 {strides = array<i32>} : memref<16x96xf32, #tpu.memory_space<vmem>>, vector<16x96xf32>,
    return
  }
  func.func @transform_0(%arg0: i32) -> (i32, i32) {
    %c0_i32 = arith.constant 0 : i32
    %c0_i32_0 = arith.constant 0 : i32
    return %arg0, %c0_i32 : i32, i32
  }
  func.func @transform_1(%arg0: i32) -> (i32, i32) {
    %c0_i32 = arith.constant 0 : i32
    %c0_i32_0 = arith.constant 0 : i32
    %c0_i32_1 = arith.constant 0 : i32
    return %c0_i32, %c0_i32_0 : i32, i32
  }
  func.func @transform_2(%arg0: i32) -> (i32, i32) {
    %c0_i32 = arith.constant 0 : i32
    %c0_i32_0 = arith.constant 0 : i32
    %c0_i32_1 = arith.constant 0 : i32
    return %c0_i32, %c0_i32_0 : i32, i32
  }
  func.func @transform_3(%arg0: i32) -> (i32, i32) {
    %c0_i32 = arith.constant 0 : i32
    %c0_i32_0 = arith.constant 0 : i32
    return %arg0, %c0_i32 : i32, i32
  }
}

</mosaic_0001>

<llo_original>
// kernel: tpu_custom_call.1
$region0: #{tpu_custom_call.1}
  #allocation0 [shape = 'u32[]', space=smem, size = 0x4, offset = 0x4, fixed_abs, tag = 'smem constant byte address 0x4 - core index']
  #allocation1 [shape = 'u32[144,128]{1,0:T(1,128)}', space=vmem, size = 0x12000, scoped, tag = 'internal scratch']
  %s0 = inlined_call_operand.hbm [shape: f32[16,32], index: 0, kind: input, shape index: {}]
  %s1 = inlined_call_operand.hbm [shape: f32[32,96], index: 1, kind: input, shape index: {}]
  %s2 = inlined_call_operand.vmem [shape: f32[1,96], index: 2, kind: input, shape index: {}]
  %s3 = inlined_call_operand.hbm [shape: f32[16,96], index: 3, kind: output, shape index: {}]
  %s4 = sld [smem:[#allocation0]]
  $region30: #{tpu_custom_call.1} parent=0
    _
  %s6 = ssub.s32 1, %s4
  %s7 = scalar_select 0, %s6, %s4
  $region1: #{tpu_custom_call.1} parent=0
    #allocation2 [shape = 'u8[8192]{0}', space=vmem, size = 0x2000, scoped, tag = 'input window, operand 0, single buffered']
    #allocation3 [shape = 's32[1]{0}', space=sflag, size = 0x4, scoped, tag = 'scoped memory for tpu_custom_call.1']
    #allocation4 [shape = 's32[1]{0}', space=sflag, size = 0x4, scoped, tag = 'scoped memory for tpu_custom_call.1']
    #allocation5 [shape = 'u8[16384]{0}', space=vmem, size = 0x4000, scoped, tag = 'input window, operand 1, single buffered']
    #allocation6 [shape = 's32[1]{0}', space=sflag, size = 0x4, scoped, tag = 'scoped memory for tpu_custom_call.1']
    #allocation7 [shape = 'u8[8192]{0}', space=vmem, size = 0x2000, scoped, tag = 'output window, operand 0, single buffered']
    %8 = vsyncpa [#allocation3], 0
    %9 = vsyncpa [#allocation6], 0
    %10 = vsyncpa [#allocation4], 0
    // Predicated region
    $region2: #{tpu_custom_call.1} parent=1 // pred_check
      _
    $region3: #{tpu_custom_call.1} parent=1 // pred_check_branch
      %12 = sbr.rel (0) target = $region5
    $region4: #{tpu_custom_call.1} parent=1 // pred_region
      %s14 = ssub.s32 256, 256
      %15 = vsyncadd [#allocation3], %s14
      %s16 = sshll.u32 [#allocation2], 4
      %s17 = int_to_ptr.vmem [resolvable:$true] %s16
      %22 = dma.hbm_to_vmem [thread:$0]  %s0, 256, %s17, [#allocation3], 128, 128, 8
    $region5: #{tpu_custom_call.1} parent=1 // pred_fallthru
      _
    // Predicated region
    $region6: #{tpu_custom_call.1} parent=1 // pred_check
      _
    $region7: #{tpu_custom_call.1} parent=1 // pred_check_branch
      %24 = sbr.rel (0) target = $region9
    $region8: #{tpu_custom_call.1} parent=1 // pred_region
      %s26 = ssub.s32 512, 512
      %27 = vsyncadd [#allocation6], %s26
      %s28 = sshll.u32 [#allocation5], 4
      %s29 = int_to_ptr.vmem [resolvable:$true] %s28
      %34 = dma.hbm_to_vmem [thread:$0]  %s1, 512, %s29, [#allocation6], 128, 128, 8
    $region9: #{tpu_custom_call.1} parent=1 // pred_fallthru
      _
    // Predicated region
    $region10: #{tpu_custom_call.1} parent=1 // pred_check
      _
    $region11: #{tpu_custom_call.1} parent=1 // pred_check_branch
      %36 = sbr.rel (0) target = $region13
    $region12: #{tpu_custom_call.1} parent=1 // pred_region
      _
    $region13: #{tpu_custom_call.1} parent=1 // pred_fallthru
      _
    // Predicated region
    $region14: #{tpu_custom_call.1} parent=1 // pred_check
      _
    $region15: #{tpu_custom_call.1} parent=1 // pred_check_branch
      %38 = sbr.rel (0) target = $region17
    $region16: #{tpu_custom_call.1} parent=1 // pred_region
      %39 = dma.done [#allocation3], 256
    $region17: #{tpu_custom_call.1} parent=1 // pred_fallthru
      _
    // Predicated region
    $region18: #{tpu_custom_call.1} parent=1 // pred_check
      _
    $region19: #{tpu_custom_call.1} parent=1 // pred_check_branch
      %41 = sbr.rel (0) target = $region21
    $region20: #{tpu_custom_call.1} parent=1 // pred_region
      %42 = dma.done [#allocation6], 512
    $region21: #{tpu_custom_call.1} parent=1 // pred_fallthru
      _
    %v43 = vld [vmem:[#allocation2] sm:$0xff]
    %v44 = vld [vmem:[#allocation2 + $0x8] sm:$0xff]
    %v45 = vld [vmem:[#allocation5] sm:$0xff]
    %v46 = vld [vmem:[#allocation5 + $0x8] sm:$0xff]
    %v47 = vld [vmem:[#allocation5 + $0x10] sm:$0xff]
    %v48 = vld [vmem:[#allocation5 + $0x18] sm:$0xff]
    %v49 = vld [vmem:[%s2] sm:$0x1]
    %v51 = vlaneseq
    %v52 = vshrl.u32 %v51, 7
    %v53 = vsub.s32 0, %v52
    %v54 = vrot.slane %v49, %v53
    %vm56 = vcmask 261120
    %v58 = vsel %vm56, %v43, 0
    %v61 = vsel %vm56, %v44, 0
    %63 = vmatprep.subr.mxu0 0.0
    %64 = vmatpush1.msra.mxu0 %v45
    %65 = vmatprep.subr.mxu0 0.0
    %66 = vmatpush1.msra.mxu0 %v46
    %67 = vmatprep.subr.mxu0 0.0
    %68 = vmatpush1.msra.mxu0 %v47
    %69 = vmatprep.subr.mxu0 0.0
    %70 = vmatpush1.msra.mxu0 %v48
    %71 = vmatprep.subr.mxu0 0.0
    %72 = vmatpush1.msra.mxu0 0.0
    %73 = vmatprep.subr.mxu0 0.0
    %74 = vmatpush1.msra.mxu0 0.0
    %75 = vmatprep.subr.mxu0 0.0
    %76 = vmatpush1.msra.mxu0 0.0
    %77 = vmatprep.subr.mxu0 0.0
    %78 = vmatpush1.msra.mxu0 0.0
    %79 = vmatprep.subr.mxu0 0.0
    %80 = vmatpush1.msra.mxu0 0.0
    %81 = vmatprep.subr.mxu0 0.0
    %82 = vmatpush1.msra.mxu0 0.0
    %83 = vmatprep.subr.mxu0 0.0
    %84 = vmatpush1.msra.mxu0 0.0
    %85 = vmatprep.subr.mxu0 0.0
    %86 = vmatpush1.msra.mxu0 0.0
    %87 = vmatprep.subr.mxu0 0.0
    %88 = vmatpush1.msra.mxu0 0.0
    %89 = vmatprep.subr.mxu0 0.0
    %90 = vmatpush1.msra.mxu0 0.0
    %91 = vmatprep.subr.mxu0 0.0
    %92 = vmatpush1.msra.mxu0 0.0
    %93 = vmatprep.subr.mxu0 0.0
    %94 = vmatpush1.msra.mxu0 0.0
    %95 = vmatprep.subr.mxu0 0.0
    %96 = vmatpush1.msra.mxu0 0.0
    %97 = vmatprep.subr.mxu0 0.0
    %98 = vmatpush1.msra.mxu0 0.0
    %99 = vmatprep.subr.mxu0 0.0
    %100 = vmatpush1.msra.mxu0 0.0
    %101 = vmatprep.subr.mxu0 0.0
    %102 = vmatpush1.msra.mxu0 0.0
    %103 = vmatprep.subr.mxu0 0.0
    %104 = vmatpush1.msra.mxu0 0.0
    %105 = vmatprep.subr.mxu0 0.0
    %106 = vmatpush1.msra.mxu0 0.0
    %107 = vmatprep.subr.mxu0 0.0
    %108 = vmatpush1.msra.mxu0 0.0
    %109 = vmatprep.subr.mxu0 0.0
    %110 = vmatpush1.msra.mxu0 0.0
    %111 = vmatprep.subr.mxu0 0.0
    %112 = vmatpush1.msra.mxu0 0.0
    %113 = vmatprep.subr.mxu0 0.0
    %114 = vmatpush1.msra.mxu0 0.0
    %115 = vmatprep.subr.mxu0 0.0
    %116 = vmatpush1.msra.mxu0 0.0
    %117 = vmatprep.subr.mxu0 0.0
    %118 = vmatpush1.msra.mxu0 0.0
    %119 = vmatprep.subr.mxu0 0.0
    %120 = vmatpush1.msra.mxu0 0.0
    %121 = vmatprep.subr.mxu0 0.0
    %122 = vmatpush1.msra.mxu0 0.0
    %123 = vmatprep.subr.mxu0 0.0
    %124 = vmatpush1.msra.mxu0 0.0
    %125 = vmatprep.subr.mxu0 0.0
    %126 = vmatpush1.msra.mxu0 0.0
    %127 = vmatprep.mubr.f32.mxu0 0.0
    %128 = vmatmul.mubr.f32.gmra.mrb[0].mxu0 %v58
    %v129 = vpop.f32.mrb[0].mxu0
    %v130 = vadd.f32 %v54, %v129
    %v131 = vpop.f32.mrb[0].mxu0
    %132 = vmatprep.mubr.f32.mxu0 0.0
    %133 = vmatmul.mubr.f32.gmra.mrb[0].mxu0 %v61
    %v134 = vpop.f32.mrb[0].mxu0
    %v135 = vadd.f32 %v54, %v134
    %v136 = vpop.f32.mrb[0].mxu0
    %137 = vdwg.mxu0
    %vm138 = vcmask 785408
    %139 = vst.msk [vmem:[#allocation7] sm:$0xff] %vm138, %v130
    %140 = vst.msk [vmem:[#allocation7 + $0x8] sm:$0xff] %vm138, %v135
    // Predicated region
    $region22: #{tpu_custom_call.1} parent=1 // pred_check
      _
    $region23: #{tpu_custom_call.1} parent=1 // pred_check_branch
      %142 = sbr.rel (0) target = $region25
    $region24: #{tpu_custom_call.1} parent=1 // pred_region
      %s144 = ssub.s32 256, 256
      %145 = vsyncadd [#allocation4], %s144
      %s146 = sshll.u32 [#allocation7], 4
      %s147 = int_to_ptr.vmem [resolvable:$true] %s146
      %152 = dma.vmem_to_hbm [thread:$0]  %s147, 256, %s3, [#allocation4], 128, 128, 8
    $region25: #{tpu_custom_call.1} parent=1 // pred_fallthru
      _
    // Predicated region
    $region26: #{tpu_custom_call.1} parent=1 // pred_check
      _
    $region27: #{tpu_custom_call.1} parent=1 // pred_check_branch
      %154 = sbr.rel (0) target = $region29
    $region28: #{tpu_custom_call.1} parent=1 // pred_region
      %155 = dma.done [#allocation4], 256
    $region29: #{tpu_custom_call.1} parent=1 // pred_fallthru
      _
    %156 = vsyncpa [#allocation3], 1
    %157 = vsyncpa [#allocation6], 1
    %158 = vsyncpa [#allocation4], 1

</llo_original>
